<compile_context>
chip_gen: v7x
topology: tpu7x:2x2x1
jax: 0.10.0
libtpu: 0.0.40
codegen_flags: <defaults>
</compile_context>

<pallas_src>
import functools
import math

import jax
import jax.numpy as jnp
from jax.experimental import pallas as pl
from jax.experimental.pallas import tpu as pltpu

MiB = 1024 * 1024
_LANE = 128
_SUBLANE = 8


def _round_up(x, m):
    return ((x + m - 1) // m) * m


def _pad2d(a, rows, cols):
    r, c = a.shape
    if r == rows and c == cols:
        return a
    return jnp.pad(a, ((0, rows - r), (0, cols - c)))


def _balanced_tile(m, target, align=_SUBLANE):
    """Split m into near-equal tiles (<= align-1 padded rows per tile)."""
    m_al = _round_up(max(m, 1), align)
    if m_al <= target:
        return m_al
    n_tiles = -(-m_al // target)
    return _round_up(-(-m_al // n_tiles), align)


def _vmem_capacity_bytes():
    try:
        return int(pltpu.get_tpu_info().vmem_capacity_bytes)
    except Exception:
        return 64 * MiB  # conservative (v7x per-TC physical VMEM)


_VMEM_CAP = _vmem_capacity_bytes()
# Never hand the whole physical VMEM to one kernel: leave compiler headroom.
_VMEM_LIMIT_MAX = max(32 * MiB, min(_VMEM_CAP - 12 * MiB, 112 * MiB))
# Budget for keeping a whole (Hp,Hp)+(Hp,Op) weight pair resident + pipelining.
_FUSED_VMEM_BUDGET = max(24 * MiB, min(_VMEM_CAP - 24 * MiB, 100 * MiB))
# Bigger M tiles amortize weight re-streaming where VMEM allows it.
_TM_TARGET = 512 if _VMEM_CAP >= 96 * MiB else 256


def _fused_vmem_need(tm, Hp, Op):
    return (2 * tm * Hp * 4                   # x tile (double-buffered, f32)
            + 2 * (Hp * Hp * 2 + Hp * 4)      # hidden W (bf16) + bias (f32)
            + 2 * (Hp * Op * 2 + Op * 4)      # final W (bf16) + bias (f32)
            + 2 * tm * Op * 4                 # output tile (f32)
            + tm * Hp * 4)                    # activation scratch (f32)


# ---------------------------------------------------------------------------
# Fused multi-layer MLP kernel: grid = (M tiles, layers)
# ---------------------------------------------------------------------------
def _fused_mlp_kernel(x_ref, wh_ref, bh_ref, wo_ref, bo_ref, o_ref, act_ref,
                      *, final_relu):
    # x_ref:(tm,Hp) f32   wh_ref:(1,Hp,Hp) bf16  bh_ref:(1,1,Hp) f32
    # wo_ref:(Hp,Op) bf16 bo_ref:(1,Op) f32      o_ref:(tm,Op) f32
    # act_ref:(tm,Hp) f32 scratch carried across the layer axis.
    l = pl.program_id(1)
    nl = pl.num_programs(1)

    @pl.when(l == 0)
    def _():
        act_ref[...] = x_ref[...].astype(jnp.float32)

    @pl.when(l < nl - 1)
    def _():  # hidden layer: Linear(inp, inp) + ReLU
        a = act_ref[...].astype(jnp.bfloat16)
        y = jnp.dot(a, wh_ref[0], preferred_element_type=jnp.float32)
        act_ref[...] = jnp.maximum(y + bh_ref[0], 0.0)

    @pl.when(l == nl - 1)
    def _():  # final layer: Linear(inp, out) [+ ReLU]
        a = act_ref[...].astype(jnp.bfloat16)
        y = jnp.dot(a, wo_ref[...], preferred_element_type=jnp.float32)
        y = y + bo_ref[...]
        if final_relu:
            y = jnp.maximum(y, 0.0)
        o_ref[...] = y.astype(o_ref.dtype)


def fused_mlp_pallas(x, wh_stack, bh_stack, wo, bo, final_relu):
    """x:(M,K<=Hp); wh:(Lh,Hp,Hp) bf16; bh:(Lh,1,Hp) f32; wo:(Hp,Op) bf16; bo:(1,Op) f32."""
    M, _ = x.shape
    Lh, Hp, _ = wh_stack.shape
    _, Op = wo.shape
    L = Lh + 1

    tm = _balanced_tile(M, _TM_TARGET)
    Mp = _round_up(M, tm)
    xp = _pad2d(x, Mp, Hp)

    need = _fused_vmem_need(tm, Hp, Op)
    vmem_limit = int(min(max(need + 8 * MiB, 32 * MiB), _VMEM_LIMIT_MAX))

    n_m = Mp // tm
    flops = 2 * Mp * Hp * Hp * Lh + 2 * Mp * Hp * Op
    bytes_accessed = (Mp * Hp * 4 + Mp * Op * 4
                      + n_m * Lh * (Hp * Hp * 2 + Hp * 4)   # hidden weights re-streamed per M tile
                      + Hp * Op * 2 + Op * 4)               # final weight DMA'd once

    kernel = functools.partial(_fused_mlp_kernel, final_relu=final_relu)
    return pl.pallas_call(
        kernel,
        out_shape=jax.ShapeDtypeStruct((Mp, Op), x.dtype),
        grid_spec=pltpu.PrefetchScalarGridSpec(
            num_scalar_prefetch=0,
            grid=(n_m, L),
            in_specs=[
                pl.BlockSpec((tm, Hp), lambda i, l: (i, 0)),
                # clamp so the last grid step re-uses the previous block (no OOB, no re-DMA)
                pl.BlockSpec((1, Hp, Hp),
                             lambda i, l: (jnp.minimum(l, Lh - 1), 0, 0)),
                pl.BlockSpec((1, 1, Hp),
                             lambda i, l: (jnp.minimum(l, Lh - 1), 0, 0)),
                pl.BlockSpec((Hp, Op), lambda i, l: (0, 0)),
                pl.BlockSpec((1, Op), lambda i, l: (0, 0)),
            ],
            out_specs=pl.BlockSpec((tm, Op), lambda i, l: (i, 0)),
            scratch_shapes=[pltpu.VMEM((tm, Hp), jnp.float32)],
        ),
        compiler_params=pltpu.CompilerParams(
            dimension_semantics=("parallel", "arbitrary"),
            vmem_limit_bytes=vmem_limit,
        ),
        cost_estimate=pl.CostEstimate(
            flops=flops, transcendentals=0, bytes_accessed=bytes_accessed),
    )(xp, wh_stack, bh_stack, wo, bo)


# ---------------------------------------------------------------------------
# Fallback: single Linear layer, (M, N, K)-tiled with f32 accumulator
# ---------------------------------------------------------------------------
def _linear_tiled_kernel(x_ref, w_ref, b_ref, o_ref, acc_ref, *, apply_relu):
    # x_ref:(tm,tk) f32  w_ref:(tk,tn) bf16  b_ref:(1,tn) f32  o/acc:(tm,tn) f32
    k = pl.program_id(2)

    @pl.when(k == 0)
    def _():
        acc_ref[...] = jnp.zeros_like(acc_ref)

    acc_ref[...] += jnp.dot(x_ref[...].astype(jnp.bfloat16), w_ref[...],
                            preferred_element_type=jnp.float32)

    @pl.when(k == pl.num_programs(2) - 1)
    def _():
        y = acc_ref[...] + b_ref[...]
        if apply_relu:
            y = jnp.maximum(y, 0.0)
        o_ref[...] = y.astype(o_ref.dtype)


def linear_pallas_tiled(x, wt, b, apply_relu, *, tm=512, tn=512, tk=512):
    """y = optional_relu(x @ wt + b); wt is already (in, out)."""
    M, K = x.shape
    K2, N = wt.shape
    assert K == K2

    tm = _balanced_tile(M, tm)
    tn = min(tn, _round_up(N, _LANE))
    tk = min(tk, _round_up(K, _LANE))
    Mp, Np, Kp = _round_up(M, tm), _round_up(N, tn), _round_up(K, tk)

    xp = _pad2d(x, Mp, Kp)
    wp = _pad2d(wt, Kp, Np).astype(jnp.bfloat16)
    bp = _pad2d(b.reshape(1, N).astype(jnp.float32), 1, Np)

    vmem_need = (2 * (tm * tk * 4 + tk * tn * 2 + tn * 4)
                 + 2 * tm * tn * 4 + tm * tn * 4)
    vmem_limit = int(min(max(vmem_need + 8 * MiB, 32 * MiB), _VMEM_LIMIT_MAX))

    n_m, n_n = Mp // tm, Np // tn
    flops = 2 * Mp * Kp * Np
    bytes_accessed = (n_n * Mp * Kp * 4 + n_m * Kp * Np * 2
                      + Np * 4 + Mp * Np * 4)

    kernel = functools.partial(_linear_tiled_kernel, apply_relu=apply_relu)
    out = pl.pallas_call(
        kernel,
        out_shape=jax.ShapeDtypeStruct((Mp, Np), x.dtype),
        grid_spec=pltpu.PrefetchScalarGridSpec(
            num_scalar_prefetch=0,
            grid=(n_m, n_n, Kp // tk),
            in_specs=[
                pl.BlockSpec((tm, tk), lambda i, j, k: (i, k)),
                pl.BlockSpec((tk, tn), lambda i, j, k: (k, j)),
                pl.BlockSpec((1, tn), lambda i, j, k: (0, j)),
            ],
            out_specs=pl.BlockSpec((tm, tn), lambda i, j, k: (i, j)),
            scratch_shapes=[pltpu.VMEM((tm, tn), jnp.float32)],
        ),
        compiler_params=pltpu.CompilerParams(
            dimension_semantics=("parallel", "parallel", "arbitrary"),
            vmem_limit_bytes=vmem_limit,
        ),
        cost_estimate=pl.CostEstimate(
            flops=flops, transcendentals=0, bytes_accessed=bytes_accessed),
    )(xp, wp, bp)
    return out[:M, :N]


# ---------------------------------------------------------------------------
# Parameter init / packing / forward
# ---------------------------------------------------------------------------
def init_mlp_params(key, inp_dim, out_dim, num_layers=1, bias=True):
    """Mirrors nn.Linear default init (uniform +/- 1/sqrt(fan_in)), (out, in) layout."""
    params = []
    dims = [(inp_dim, inp_dim)] * (num_layers - 1) + [(inp_dim, out_dim)]
    for fan_in, fan_out in dims:
        key, kw, kb = jax.random.split(key, 3)
        bound = 1.0 / math.sqrt(fan_in)
        w = jax.random.uniform(kw, (fan_out, fan_in), jnp.float32, -bound, bound)
        b = (jax.random.uniform(kb, (fan_out,), jnp.float32, -bound, bound)
             if bias else jnp.zeros((fan_out,), jnp.float32))
        params.append((w, b))
    return params


def pack_mlp_params(params):
    """One-time prep: transpose (out,in)->(in,out), pad features to 128-multiples,
    stack hidden layers, cast weights to bf16 (f32 accumulation in-kernel)."""
    inp_dim = params[0][0].shape[1]
    out_dim = params[-1][0].shape[0]
    L = len(params)
    Hp = _round_up(inp_dim, _LANE)
    Op = _round_up(out_dim, _LANE)

    if L >= 2 and _fused_vmem_need(_TM_TARGET, Hp, Op) <= _FUSED_VMEM_BUDGET:
        hidden = params[:-1]
        wo_raw, bo_raw = params[-1]
        wh = jnp.stack([_pad2d(w.T, Hp, Hp) for (w, _) in hidden]).astype(jnp.bfloat16)
        bh = jnp.stack([_pad2d(b.reshape(1, -1).astype(jnp.float32), 1, Hp)
                        for (_, b) in hidden])
        wo = _pad2d(wo_raw.T, Hp, Op).astype(jnp.bfloat16)
        bo = _pad2d(bo_raw.reshape(1, -1).astype(jnp.float32), 1, Op)
        return {"mode": "fused", "wh": wh, "bh": bh, "wo": wo, "bo": bo,
                "inp_dim": inp_dim, "out_dim": out_dim}
    # TODO(synk): for layer widths beyond the fused VMEM budget, keep the
    # (M, L) fusion and tile the weight K dimension in-kernel
    # (pltpu.emit_pipeline) instead of per-layer HBM activation round trips.
    layers = [(w.T, b) for (w, b) in params]
    return {"mode": "layered", "layers": layers,
            "inp_dim": inp_dim, "out_dim": out_dim}


def mlp_forward(packed, x, relu=True):
    """Matches MLP.forward: (num_layers-1) x [Linear+ReLU], Linear, optional ReLU."""
    M = x.shape[0]
    out_dim = packed["out_dim"]
    if packed["mode"] == "fused":
        y = fused_mlp_pallas(x, packed["wh"], packed["bh"],
                             packed["wo"], packed["bo"], final_relu=relu)
        return y[:M, :out_dim]
    layers = packed["layers"]
    n = len(layers)
    for i, (wt, b) in enumerate(layers):
        apply_relu = (i < n - 1) or relu
        x = linear_pallas_tiled(x, wt, b, apply_relu)
    return x


# ---------------------------------------------------------------------------
if __name__ == "__main__":
    key = jax.random.PRNGKey(0)
    key, kx = jax.random.split(key)

    batch, inp_dim, out_dim, num_layers = 8, 32, 16, 3
    x = jax.random.normal(kx, (batch, inp_dim), jnp.float32)

    params = init_mlp_params(key, inp_dim, out_dim, num_layers=num_layers,
                             bias=True)
    packed = pack_mlp_params(params)
    assert packed["mode"] == "fused"

    def ref_mlp(params, x, relu):
        y = x
        n = len(params)
        for i, (w, b) in enumerate(params):
            y = y @ w.T + b
            if i < n - 1 or relu:
                y = jnp.maximum(y, 0.0)
        return y

    # --- fused kernel, relu=True (MLP(..., relu=True)) ---
    out = jax.block_until_ready(mlp_forward(packed, x, relu=True))
    assert out.shape == (batch, out_dim)
    assert jnp.allclose(out, ref_mlp(params, x, True), atol=5e-2, rtol=5e-2), \
        "fused relu=True mismatch"

    # --- fused kernel, relu=False (no ReLU after the last Linear) ---
    out_nf = jax.block_until_ready(mlp_forward(packed, x, relu=False))
    assert jnp.allclose(out_nf, ref_mlp(params, x, False), atol=5e-2, rtol=5e-2), \
        "fused relu=False mismatch"

    # --- exercise the tiled fallback kernel (multi-step K reduction, bf16) ---
    key, k1, k2, k3 = jax.random.split(key, 4)
    tM, tK, tN = 96, 1100, 200
    xt = jax.random.normal(k1, (tM, tK), jnp.float32)
    wtt = jax.random.normal(k2, (tK, tN), jnp.float32) * 0.05
    bt = jax.random.normal(k3, (tN,), jnp.float32)
    yt = jax.block_until_ready(linear_pallas_tiled(xt, wtt, bt, apply_relu=True))
    rt = jnp.maximum(
        jnp.dot(xt, wtt, precision=jax.lax.Precision.HIGHEST) + bt, 0.0)
    assert jnp.allclose(yt, rt, atol=6e-2, rtol=6e-2), "tiled linear mismatch"

    # --- num_layers == 1 path (single Linear via the tiled kernel) ---
    params1 = init_mlp_params(key, inp_dim, out_dim, num_layers=1, bias=True)
    packed1 = pack_mlp_params(params1)
    out1 = jax.block_until_ready(mlp_forward(packed1, x, relu=True))
    assert jnp.allclose(out1, ref_mlp(params1, x, True), atol=5e-2, rtol=5e-2), \
        "single-layer mismatch"

    print("KERNEL_OK")
</pallas_src>

<mosaic_0001>
module attributes {stable_mosaic.version = 11 : i64} {
  func.func @_fused_mlp_kernel(%arg0: i32, %arg1: i32, %arg2: memref<8x128xf32, #tpu.memory_space<vmem>>, %arg3: memref<1x128x128xbf16, #tpu.memory_space<vmem>>, %arg4: memref<1x1x128xf32, #tpu.memory_space<vmem>>, %arg5: memref<128x128xbf16, #tpu.memory_space<vmem>>, %arg6: memref<1x128xf32, #tpu.memory_space<vmem>>, %arg7: memref<8x128xf32, #tpu.memory_space<vmem>>, %arg8: memref<8x128xf32, #tpu.memory_space<vmem>>) attributes {dimension_semantics = [#tpu.dimension_semantics<parallel>, #tpu.dimension_semantics<arbitrary>], iteration_bounds = array<i64: 1, 3>, scalar_prefetch = 0 : i64, scratch_operands = 1 : i64, tpu.core_type = #tpu.core_type<tc>, window_params = [{transform_indices = @transform_0, window_bounds = array<i64: 8, 128>}, {transform_indices = @transform_1, window_bounds = array<i64: 1, 128, 128>}, {transform_indices = @transform_2, window_bounds = array<i64: 1, 1, 128>}, {pipeline_mode = #tpu.pipeline_mode<synchronous>, transform_indices = @transform_3, window_bounds = array<i64: 128, 128>}, {pipeline_mode = #tpu.pipeline_mode<synchronous>, transform_indices = @transform_4, window_bounds = array<i64: 1, 128>}, {transform_indices = @transform_5, window_bounds = array<i64: 8, 128>}]} {
    %c0_i32 = arith.constant 0 : i32
    %0 = arith.cmpi eq, %arg1, %c0_i32 : i32
    %1 = arith.extui %0 : i1 to i32
    %c0_i32_0 = arith.constant 0 : i32
    %2 = arith.cmpi ne, %1, %c0_i32_0 : i32
    scf.if %2 {
      %c0 = arith.constant 0 : index
      %c0_4 = arith.constant 0 : index
      %9 = vector.load %arg2[%c0, %c0_4] : memref<8x128xf32, #tpu.memory_space<vmem>>, vector<8x128xf32>
      %c0_5 = arith.constant 0 : index
      %c0_6 = arith.constant 0 : index
      %10 = vector.load %arg8[%c0_5, %c0_6] : memref<8x128xf32, #tpu.memory_space<vmem>>, vector<8x128xf32>
      tpu.vector_store %arg8[%c0_5, %c0_6], %9 {strides = array<i32>} : memref<8x128xf32, #tpu.memory_space<vmem>>, vector<8x128xf32>,
    } else {
    }
    %c2_i32 = arith.constant 2 : i32
    %3 = arith.cmpi slt, %arg1, %c2_i32 : i32
    %4 = arith.extui %3 : i1 to i32
    %c0_i32_1 = arith.constant 0 : i32
    %5 = arith.cmpi ne, %4, %c0_i32_1 : i32
    scf.if %5 {
      %c0 = arith.constant 0 : index
      %c0_4 = arith.constant 0 : index
      %9 = vector.load %arg8[%c0, %c0_4] : memref<8x128xf32, #tpu.memory_space<vmem>>, vector<8x128xf32>
      %10 = arith.truncf %9 : vector<8x128xf32> to vector<8x128xbf16>
      %c0_5 = arith.constant 0 : index
      %c0_6 = arith.constant 0 : index
      %c0_7 = arith.constant 0 : index
      %11 = vector.load %arg3[%c0_5, %c0_6, %c0_7] : memref<1x128x128xbf16, #tpu.memory_space<vmem>>, vector<1x128x128xbf16>
      %12 = vector.shape_cast %11 : vector<1x128x128xbf16> to vector<128x128xbf16>
      %cst = arith.constant dense<0.000000e+00> : vector<8x128xf32>
      %13 = tpu.matmul %10, %12, %cst {dimension_numbers = #tpu.dot_dimension_numbers<[1], [0], [0], [1], [0, 0, 1, 1], [], []>} : vector<8x128xbf16>, vector<128x128xbf16>, vector<8x128xf32> -> vector<8x128xf32>
      %c0_8 = arith.constant 0 : index
      %c0_9 = arith.constant 0 : index
      %c0_10 = arith.constant 0 : index
      %14 = vector.load %arg4[%c0_8, %c0_9, %c0_10] : memref<1x1x128xf32, #tpu.memory_space<vmem>>, vector<1x1x128xf32>
      %15 = vector.shape_cast %14 : vector<1x1x128xf32> to vector<1x128xf32>
      %16 = vector.broadcast %15 : vector<1x128xf32> to vector<8x128xf32>
      %17 = arith.addf %13, %16 : vector<8x128xf32>
      %cst_11 = arith.constant 0.000000e+00 : f32
      %18 = vector.broadcast %cst_11 : f32 to vector<8x128xf32>
      %19 = arith.maximumf %17, %18 : vector<8x128xf32>
      %c0_12 = arith.constant 0 : index
      %c0_13 = arith.constant 0 : index
      %20 = vector.load %arg8[%c0_12, %c0_13] : memref<8x128xf32, #tpu.memory_space<vmem>>, vector<8x128xf32>
      tpu.vector_store %arg8[%c0_12, %c0_13], %19 {strides = array<i32>} : memref<8x128xf32, #tpu.memory_space<vmem>>, vector<8x128xf32>,
    } else {
    }
    %c2_i32_2 = arith.constant 2 : i32
    %6 = arith.cmpi eq, %arg1, %c2_i32_2 : i32
    %7 = arith.extui %6 : i1 to i32
    %c0_i32_3 = arith.constant 0 : i32
    %8 = arith.cmpi ne, %7, %c0_i32_3 : i32
    scf.if %8 {
      %c0 = arith.constant 0 : index
      %c0_4 = arith.constant 0 : index
      %9 = vector.load %arg8[%c0, %c0_4] : memref<8x128xf32, #tpu.memory_space<vmem>>, vector<8x128xf32>
      %10 = arith.truncf %9 : vector<8x128xf32> to vector<8x128xbf16>
      %c0_5 = arith.constant 0 : index
      %c0_6 = arith.constant 0 : index
      %11 = vector.load %arg5[%c0_5, %c0_6] : memref<128x128xbf16, #tpu.memory_space<vmem>>, vector<128x128xbf16>
      %cst = arith.constant dense<0.000000e+00> : vector<8x128xf32>
      %12 = tpu.matmul %10, %11, %cst {dimension_numbers = #tpu.dot_dimension_numbers<[1], [0], [0], [1], [0, 0, 1, 1], [], []>} : vector<8x128xbf16>, vector<128x128xbf16>, vector<8x128xf32> -> vector<8x128xf32>
      %c0_7 = arith.constant 0 : index
      %c0_8 = arith.constant 0 : index
      %13 = vector.load %arg6[%c0_7, %c0_8] : memref<1x128xf32, #tpu.memory_space<vmem>>, vector<1x128xf32>
      %14 = vector.broadcast %13 : vector<1x128xf32> to vector<8x128xf32>
      %15 = arith.addf %12, %14 : vector<8x128xf32>
      %cst_9 = arith.constant 0.000000e+00 : f32
      %16 = vector.broadcast %cst_9 : f32 to vector<8x128xf32>
      %17 = arith.maximumf %15, %16 : vector<8x128xf32>
      %c0_10 = arith.constant 0 : index
      %c0_11 = arith.constant 0 : index
      %18 = vector.load %arg7[%c0_10, %c0_11] : memref<8x128xf32, #tpu.memory_space<vmem>>, vector<8x128xf32>
      tpu.vector_store %arg7[%c0_10, %c0_11], %17 {strides = array<i32>} : memref<8x128xf32, #tpu.memory_space<vmem>>, vector<8x128xf32>,
    } else {
    }
    return
  }
  func.func @transform_0(%arg0: i32, %arg1: i32) -> (i32, i32) {
    %c0_i32 = arith.constant 0 : i32
    %c0_i32_0 = arith.constant 0 : i32
    return %arg0, %c0_i32 : i32, i32
  }
  func.func @transform_1(%arg0: i32, %arg1: i32) -> (i32, i32, i32) {
    %c1_i32 = arith.constant 1 : i32
    %0 = arith.minsi %arg1, %c1_i32 : i32
    %c0_i32 = arith.constant 0 : i32
    %c0_i32_0 = arith.constant 0 : i32
    %c0_i32_1 = arith.constant 0 : i32
    return %0, %c0_i32, %c0_i32_0 : i32, i32, i32
  }
  func.func @transform_2(%arg0: i32, %arg1: i32) -> (i32, i32, i32) {
    %c1_i32 = arith.constant 1 : i32
    %0 = arith.minsi %arg1, %c1_i32 : i32
    %c0_i32 = arith.constant 0 : i32
    %c0_i32_0 = arith.constant 0 : i32
    %c0_i32_1 = arith.constant 0 : i32
    return %0, %c0_i32, %c0_i32_0 : i32, i32, i32
  }
  func.func @transform_3(%arg0: i32, %arg1: i32) -> (i32, i32) {
    %c0_i32 = arith.constant 0 : i32
    %c0_i32_0 = arith.constant 0 : i32
    %c0_i32_1 = arith.constant 0 : i32
    return %c0_i32, %c0_i32_0 : i32, i32
  }
  func.func @transform_4(%arg0: i32, %arg1: i32) -> (i32, i32) {
    %c0_i32 = arith.constant 0 : i32
    %c0_i32_0 = arith.constant 0 : i32
    %c0_i32_1 = arith.constant 0 : i32
    return %c0_i32, %c0_i32_0 : i32, i32
  }
  func.func @transform_5(%arg0: i32, %arg1: i32) -> (i32, i32) {
    %c0_i32 = arith.constant 0 : i32
    %c0_i32_0 = arith.constant 0 : i32
    return %arg0, %c0_i32 : i32, i32
  }
}

</mosaic_0001>

<llo_original>
// kernel: tpu_custom_call.1
$region0: #{tpu_custom_call.1}
  #allocation0 [shape = 'u32[]', space=smem, size = 0x4, offset = 0x4, fixed_abs, tag = 'smem constant byte address 0x4 - core index']
  #allocation1 [shape = 'u32[144,128]{1,0:T(1,128)}', space=vmem, size = 0x12000, scoped, tag = 'internal scratch']
  #allocation2 [shape = 'f32[8,128]{1,0:T(8,128)}', space=vmem, size = 0x1000, scoped, tag = 'scratch operand']
  %s0 = inlined_call_operand.hbm [shape: f32[8,128], index: 0, kind: input, shape index: {}]
  %s1 = inlined_call_operand.hbm [shape: bf16[2,128,128], index: 1, kind: input, shape index: {}]
  %s2 = inlined_call_operand.vmem [shape: f32[2,1,128], index: 2, kind: input, shape index: {}]
  %s3 = inlined_call_operand.hbm [shape: bf16[128,128], index: 3, kind: input, shape index: {}]
  %s4 = inlined_call_operand.vmem [shape: f32[1,128], index: 4, kind: input, shape index: {}]
  %s5 = inlined_call_operand.hbm [shape: f32[8,128], index: 5, kind: output, shape index: {}]
  %s6 = sld [smem:[#allocation0]]
  $region77: #{tpu_custom_call.1} parent=0
    _
  %s8 = ssub.s32 1, %s6
  %s9 = scalar_select 0, %s8, %s6
  $region1: #{tpu_custom_call.1} parent=0
    #allocation3 [shape = 'u8[4096]{0}', space=vmem, size = 0x1000, scoped, tag = 'input window, operand 0, single buffered']
    #allocation4 [shape = 's32[2]{0}', space=sflag, size = 0x8, scoped, tag = 'scoped memory for tpu_custom_call.1']
    #allocation5 [shape = 's32[2]{0}', space=sflag, size = 0x8, scoped, tag = 'scoped memory for tpu_custom_call.1']
    #allocation6 [shape = 'u8[65536]{0}', space=vmem, size = 0x10000, scoped, tag = 'input window, operand 1']
    #allocation7 [shape = 's32[2]{0}', space=sflag, size = 0x8, scoped, tag = 'scoped memory for tpu_custom_call.1']
    #allocation8 [shape = 'u8[32768]{0}', space=vmem, size = 0x8000, scoped, tag = 'input window, operand 3, single buffered']
    #allocation9 [shape = 'u8[4096]{0}', space=vmem, size = 0x1000, scoped, tag = 'output window, operand 0, single buffered']
    %10 = vsyncpa [#allocation4], 0
    %11 = vsyncpa [#allocation7], 0
    %s12 = scalar_lea.sflag [#allocation7], 1
    %13 = vsyncpa %s12, 0
    %14 = vsyncpa [#allocation5], 0
    loop: start=0, step=1, limit=5
    $region2: #{tpu_custom_call.1} parent=1 // loop_pre_header
      _
    $region3: #{tpu_custom_call.1} parent=1 // loop_header
      %s16 = sphi 0, %s20
      %p17 = scmp.ge.s32.totalorder %s16, 5
      %s23 = sphi 0, %s35
      %s24 = sphi 0, %s31
      %s25 = sphi 0, %s23
      %s26 = sphi 0, %s24
      %s27 = sphi 0, %s25
      %s28 = sphi 0, %s26
      %s38 = sphi 0, %s40
      %s41 = sphi 0, %s38
      %s42 = sphi 0, %s41
      %s58 = sphi 0, %s42
      %s68 = sphi 0, %s70
      %s71 = sphi 0, %s68
      %s72 = sphi 0, %s71
      %s88 = sphi 0, %s72
      %s98 = sphi 0, %s100
      %s101 = sphi 0, %s98
      %s102 = sphi 0, %s101
      %s118 = sphi 0, %s102
      %s122 = sphi 0, %s122
      %s124 = sphi 0, %s122
      %s125 = sphi 0, %s124
      %s139 = sphi 0, %s125
      %s143 = sphi 0, %s143
      %s145 = sphi 0, %s143
      %s146 = sphi 0, %s145
      %s160 = sphi 0, %s146
      %s166 = sphi 0, %s168
      %s169 = sphi 0, %s166
      %s170 = sphi 0, %s169
      %s186 = sphi 0, %s170
    $region4: #{tpu_custom_call.1} parent=1 // loop_header_branch
      %19 = sbr.rel (%p17) target = $region8
    $region5: #{tpu_custom_call.1} parent=1 // loop_body
      %s21 = ssub.s32 %s16, 1
      %s22 = ssub.s32 %s16, 2
      %s29 = sadd.s32 1, %s24
      %p30 = scmp.ge.s32.totalorder %s29, 3
      %s31 = scalar_select %p30, 0, %s29
      %s32 = sadd.s32 1, %s23
      %s33 = scalar_select %p30, %s32, %s23
      %p34 = scmp.ge.s32.totalorder %s33, 1
      %s35 = scalar_select %p34, 0, %s33
      %s36 = ssub.s32 %s23, %s35
      %p37 = scmp.eq.s32.totalorder %s36, 0
      %s39 = sadd.s32 %s38, 1
      %s40 = scalar_select %p37, %s38, %s39
      %p43 = pneg %p37
      %p44 = scmp.eq.s32.totalorder %s16, 2
      %p45 = por %p43, %p44
      %p46 = scmp.ne.s32.totalorder %s38, %s41
      %p47 = scmp.eq.s32.totalorder %s16, 0
      %p48 = por %p46, %p47
      %p49 = scmp.ne.s32.totalorder %s38, %s41
      %p50 = scmp.eq.s32.totalorder %s21, 2
      %p51 = por %p49, %p50
      %p52 = scmp.ne.s32.totalorder %s41, %s42
      %p53 = scmp.eq.s32.totalorder %s21, 0
      %p54 = por %p52, %p53
      %p55 = scmp.ne.s32.totalorder %s41, %s42
      %p56 = scmp.eq.s32.totalorder %s22, 2
      %p57 = por %p55, %p56
      %p59 = scmp.ne.s32.totalorder %s42, %s58
      %p60 = scmp.eq.s32.totalorder %s22, 0
      %p61 = por %p59, %p60
      %p62 = scmp.lt.s32.totalorder %s24, 1
      %s63 = scalar_select %p62, %s24, 1
      %p64 = scmp.lt.s32.totalorder %s31, 1
      %s65 = scalar_select %p64, %s31, 1
      %s66 = ssub.s32 %s63, %s65
      %p67 = scmp.eq.s32.totalorder %s66, 0
      %s69 = sadd.s32 %s68, 1
      %s70 = scalar_select %p67, %s68, %s69
      %p73 = pneg %p67
      %p74 = scmp.eq.s32.totalorder %s16, 2
      %p75 = por %p73, %p74
      %p76 = scmp.ne.s32.totalorder %s68, %s71
      %p77 = scmp.eq.s32.totalorder %s16, 0
      %p78 = por %p76, %p77
      %p79 = scmp.ne.s32.totalorder %s68, %s71
      %p80 = scmp.eq.s32.totalorder %s21, 2
      %p81 = por %p79, %p80
      %p82 = scmp.ne.s32.totalorder %s71, %s72
      %p83 = scmp.eq.s32.totalorder %s21, 0
      %p84 = por %p82, %p83
      %p85 = scmp.ne.s32.totalorder %s71, %s72
      %p86 = scmp.eq.s32.totalorder %s22, 2
      %p87 = por %p85, %p86
      %p89 = scmp.ne.s32.totalorder %s72, %s88
      %p90 = scmp.eq.s32.totalorder %s22, 0
      %p91 = por %p89, %p90
      %p92 = scmp.lt.s32.totalorder %s24, 1
      %s93 = scalar_select %p92, %s24, 1
      %p94 = scmp.lt.s32.totalorder %s31, 1
      %s95 = scalar_select %p94, %s31, 1
      %s96 = ssub.s32 %s93, %s95
      %p97 = scmp.eq.s32.totalorder %s96, 0
      %s99 = sadd.s32 %s98, 1
      %s100 = scalar_select %p97, %s98, %s99
      %p103 = pneg %p97
      %p104 = scmp.eq.s32.totalorder %s16, 2
      %p105 = por %p103, %p104
      %p106 = scmp.ne.s32.totalorder %s98, %s101
      %p107 = scmp.eq.s32.totalorder %s16, 0
      %p108 = por %p106, %p107
      %p109 = scmp.ne.s32.totalorder %s98, %s101
      %p110 = scmp.eq.s32.totalorder %s21, 2
      %p111 = por %p109, %p110
      %p112 = scmp.ne.s32.totalorder %s101, %s102
      %p113 = scmp.eq.s32.totalorder %s21, 0
      %p114 = por %p112, %p113
      %p115 = scmp.ne.s32.totalorder %s101, %s102
      %p116 = scmp.eq.s32.totalorder %s22, 2
      %p117 = por %p115, %p116
      %p119 = scmp.ne.s32.totalorder %s102, %s118
      %p120 = scmp.eq.s32.totalorder %s22, 0
      %p121 = por %p119, %p120
      %s123 = sadd.s32 %s122, 1
      %p126 = scmp.eq.s32.totalorder %s16, 2
      %p127 = scmp.ne.s32.totalorder %s122, %s124
      %p128 = scmp.eq.s32.totalorder %s16, 0
      %p129 = por %p127, %p128
      %p130 = scmp.ne.s32.totalorder %s122, %s124
      %p131 = scmp.eq.s32.totalorder %s21, 2
      %p132 = por %p130, %p131
      %p133 = scmp.ne.s32.totalorder %s124, %s125
      %p134 = scmp.eq.s32.totalorder %s21, 0
      %p135 = por %p133, %p134
      %p136 = scmp.ne.s32.totalorder %s124, %s125
      %p137 = scmp.eq.s32.totalorder %s22, 2
      %p138 = por %p136, %p137
      %p140 = scmp.ne.s32.totalorder %s125, %s139
      %p141 = scmp.eq.s32.totalorder %s22, 0
      %p142 = por %p140, %p141
      %s144 = sadd.s32 %s143, 1
      %p147 = scmp.eq.s32.totalorder %s16, 2
      %p148 = scmp.ne.s32.totalorder %s143, %s145
      %p149 = scmp.eq.s32.totalorder %s16, 0
      %p150 = por %p148, %p149
      %p151 = scmp.ne.s32.totalorder %s143, %s145
      %p152 = scmp.eq.s32.totalorder %s21, 2
      %p153 = por %p151, %p152
      %p154 = scmp.ne.s32.totalorder %s145, %s146
      %p155 = scmp.eq.s32.totalorder %s21, 0
      %p156 = por %p154, %p155
      %p157 = scmp.ne.s32.totalorder %s145, %s146
      %p158 = scmp.eq.s32.totalorder %s22, 2
      %p159 = por %p157, %p158
      %p161 = scmp.ne.s32.totalorder %s146, %s160
      %p162 = scmp.eq.s32.totalorder %s22, 0
      %p163 = por %p161, %p162
      %s164 = ssub.s32 %s23, %s35
      %p165 = scmp.eq.s32.totalorder %s164, 0
      %s167 = sadd.s32 %s166, 1
      %s168 = scalar_select %p165, %s166, %s167
      %p171 = pneg %p165
      %p172 = scmp.eq.s32.totalorder %s16, 2
      %p173 = por %p171, %p172
      %p174 = scmp.ne.s32.totalorder %s166, %s169
      %p175 = scmp.eq.s32.totalorder %s16, 0
      %p176 = por %p174, %p175
      %p177 = scmp.ne.s32.totalorder %s166, %s169
      %p178 = scmp.eq.s32.totalorder %s21, 2
      %p179 = por %p177, %p178
      %p180 = scmp.ne.s32.totalorder %s169, %s170
      %p181 = scmp.eq.s32.totalorder %s21, 0
      %p182 = por %p180, %p181
      %p183 = scmp.ne.s32.totalorder %s169, %s170
      %p184 = scmp.eq.s32.totalorder %s22, 2
      %p185 = por %p183, %p184
      %p187 = scmp.ne.s32.totalorder %s170, %s186
      %p188 = scmp.eq.s32.totalorder %s22, 0
      %p189 = por %p187, %p188
      %p190 = scmp.le.s32.totalorder 1, %s16
      %p191 = scmp.lt.s32.totalorder %s16, 4
      %p192 = pnand %p190, %p191
      %p193 = pneg %p192
      // Predicated region
      $region9: #{tpu_custom_call.1} parent=5 // pred_check
        _
      $region10: #{tpu_custom_call.1} parent=5 // pred_check_branch
        %195 = sbr.rel (%p192) target = $region12
      $region11: #{tpu_custom_call.1} parent=5 // pred_region
        %s196 = ssub.s32 %s16, 1
        // Predicated region
        $region13: #{tpu_custom_call.1} parent=11 // pred_check
          %p197 = pneg %p54
        $region14: #{tpu_custom_call.1} parent=11 // pred_check_branch
          %199 = sbr.rel (%p197) target = $region16
        $region15: #{tpu_custom_call.1} parent=11 // pred_region
          %s201 = ssub.s32 128, 128
          %202 = vsyncadd [#allocation4], %s201
          %s203 = smul.addr %s25, 128
          %s204 = scalar_lea.hbm %s0, %s203
          %s206 = sshll.u32 [#allocation3], 4
          %s207 = int_to_ptr.vmem [resolvable:$true] %s206
          %209 = dma.hbm_to_vmem [thread:$0]  %s204, 128, %s207, [#allocation4]
        $region16: #{tpu_custom_call.1} parent=11 // pred_fallthru
          _
        // Predicated region
        $region17: #{tpu_custom_call.1} parent=11 // pred_check
          %p210 = pneg %p135
        $region18: #{tpu_custom_call.1} parent=11 // pred_check_branch
          %212 = sbr.rel (%p210) target = $region20
        $region19: #{tpu_custom_call.1} parent=11 // pred_region
          %s214 = ssub.s32 1024, 1024
          %215 = vsyncadd [#allocation7], %s214
          %s216 = sshll.u32 [#allocation8], 4
          %s217 = int_to_ptr.vmem [resolvable:$true] %s216
          %222 = dma.hbm_to_vmem [thread:$0]  %s3, 1024, %s217, [#allocation7], 64, 64, 4
        $region20: #{tpu_custom_call.1} parent=11 // pred_fallthru
          _
        // Predicated region
        $region21: #{tpu_custom_call.1} parent=11 // pred_check
          %p223 = pneg %p156
        $region22: #{tpu_custom_call.1} parent=11 // pred_check_branch
          %225 = sbr.rel (%p223) target = $region24
        $region23: #{tpu_custom_call.1} parent=11 // pred_region
          _
        $region24: #{tpu_custom_call.1} parent=11 // pred_fallthru
          _
      $region12: #{tpu_custom_call.1} parent=5 // pred_fallthru
        _
      %p226 = scmp.lt.s32.totalorder %s16, 3
      // Predicated region
      $region25: #{tpu_custom_call.1} parent=5 // pred_check
        %p227 = pneg %p226
      $region26: #{tpu_custom_call.1} parent=5 // pred_check_branch
        %229 = sbr.rel (%p227) target = $region28
      $region27: #{tpu_custom_call.1} parent=5 // pred_region
        // Predicated region
        $region29: #{tpu_custom_call.1} parent=27 // pred_check
          %p230 = pneg %p78
        $region30: #{tpu_custom_call.1} parent=27 // pred_check_branch
          %232 = sbr.rel (%p230) target = $region32
        $region31: #{tpu_custom_call.1} parent=27 // pred_region
          %s233 = sand.u32 %s16, 1
          %s234 = scalar_lea.sflag [#allocation7], %s233
          %s235 = sand.u32 %s68, 1
          %s236 = smul.addr %s235, 64
          %s237 = scalar_lea.vmem [#allocation6], %s236
          %p238 = scmp.lt.s32.totalorder %s24, 1
          %s239 = scalar_select %p238, %s24, 1
          %s241 = ssub.s32 1024, 1024
          %242 = vsyncadd %s234, %s241
          %s243 = smul.addr %s239, 16
          %s244 = smul.addr %s243, 64
          %s245 = scalar_lea.hbm %s1, %s244
          %s246 = sshll.u32 %s237, 4
          %s247 = int_to_ptr.vmem [resolvable:$true] %s246
          %252 = dma.hbm_to_vmem [thread:$0]  %s245, 1024, %s247, %s234, 64, 64, 4
        $region32: #{tpu_custom_call.1} parent=27 // pred_fallthru
          _
        // Predicated region
        $region33: #{tpu_custom_call.1} parent=27 // pred_check
          %p253 = pneg %p108
        $region34: #{tpu_custom_call.1} parent=27 // pred_check_branch
          %255 = sbr.rel (%p253) target = $region36
        $region35: #{tpu_custom_call.1} parent=27 // pred_region
          %p256 = scmp.lt.s32.totalorder %s24, 1
          %s257 = scalar_select %p256, %s24, 1
          %p258 = scmp.lt.s32.totalorder %s257, 1
          %s259 = scalar_select %p258, %s257, 1
          %s260 = scalar_lea.vmem %s2, %s259
          %p261 = scmp.lt.s32.totalorder %s24, 1
          %s262 = scalar_select %p261, %s24, 1
        $region36: #{tpu_custom_call.1} parent=27 // pred_fallthru
          _
      $region28: #{tpu_custom_call.1} parent=5 // pred_fallthru
        _
      %p263 = scmp.le.s32.totalorder 1, %s16
      %p264 = scmp.lt.s32.totalorder %s16, 4
      %p265 = pnand %p263, %p264
      %p266 = pneg %p265
      // Predicated region
      $region37: #{tpu_custom_call.1} parent=5 // pred_check
        _
      $region38: #{tpu_custom_call.1} parent=5 // pred_check_branch
        %268 = sbr.rel (%p265) target = $region40
      $region39: #{tpu_custom_call.1} parent=5 // pred_region
        %s269 = ssub.s32 %s16, 1
        // Predicated region
        $region41: #{tpu_custom_call.1} parent=39 // pred_check
          %p270 = pneg %p54
        $region42: #{tpu_custom_call.1} parent=39 // pred_check_branch
          %272 = sbr.rel (%p270) target = $region44
        $region43: #{tpu_custom_call.1} parent=39 // pred_region
          %273 = dma.done [#allocation4], 128
        $region44: #{tpu_custom_call.1} parent=39 // pred_fallthru
          _
        %s274 = sand.u32 %s21, 1
        %s275 = scalar_lea.sflag [#allocation7], %s274
        %s276 = sand.u32 %s71, 1
        %s277 = smul.addr %s276, 64
        %s278 = scalar_lea.vmem [#allocation6], %s277
        // Predicated region
        $region45: #{tpu_custom_call.1} parent=39 // pred_check
          %p279 = pneg %p84
        $region46: #{tpu_custom_call.1} parent=39 // pred_check_branch
          %281 = sbr.rel (%p279) target = $region48
        $region47: #{tpu_custom_call.1} parent=39 // pred_region
          %282 = dma.done %s275, 1024
        $region48: #{tpu_custom_call.1} parent=39 // pred_fallthru
          _
        // Predicated region
        $region49: #{tpu_custom_call.1} parent=39 // pred_check
          %p283 = pneg %p135
        $region50: #{tpu_custom_call.1} parent=39 // pred_check_branch
          %285 = sbr.rel (%p283) target = $region52
        $region51: #{tpu_custom_call.1} parent=39 // pred_region
          %286 = dma.done [#allocation7], 1024
        $region52: #{tpu_custom_call.1} parent=39 // pred_fallthru
          _
        %p287 = pneg %p54
        %p288 = pneg %p51
        %s289 = sand.u32 %s21, 1
        %s290 = scalar_lea.sflag [#allocation7], %s289
        %s291 = sand.u32 %s71, 1
        %s292 = smul.addr %s291, 64
        %s293 = scalar_lea.vmem [#allocation6], %s292
        %p294 = pneg %p84
        %p295 = pneg %p81
        %p296 = scmp.lt.s32.totalorder %s26, 1
        %s297 = scalar_select %p296, %s26, 1
        %p298 = scmp.lt.s32.totalorder %s297, 1
        %s299 = scalar_select %p298, %s297, 1
        %s300 = scalar_lea.vmem %s2, %s299
        %p301 = pneg %p114
        %p302 = pneg %p111
        %p303 = pneg %p135
        %p304 = pneg %p132
        %p305 = pneg %p156
        %p306 = pneg %p153
        %p307 = pneg %p182
        %p308 = pneg %p179
        %p309 = scmp.lt.s32.totalorder %s26, 1
        %s310 = scalar_select %p309, %s26, 1
        %p311 = scmp.lt.s32.totalorder %s26, 1
        %s312 = scalar_select %p311, %s26, 1
        %p313 = scmp.lt.s32.totalorder %s312, 1
        %s314 = scalar_select %p313, %s312, 1
        %s315 = scalar_lea.vmem %s2, %s314
        %p316 = scmp.lt.s32.totalorder %s26, 1
        %s317 = scalar_select %p316, %s26, 1
        %p319 = scmp.eq.s32.totalorder %s26, 0
        // Predicated region
        $region53: #{tpu_custom_call.1} parent=39 // pred_check
          %p320 = pneg %p319
        $region54: #{tpu_custom_call.1} parent=39 // pred_check_branch
          %322 = sbr.rel (%p320) target = $region56
        $region55: #{tpu_custom_call.1} parent=39 // pred_region
          %v323 = vld [vmem:[#allocation3] sm:$0xff]
          %324 = vst [vmem:[#allocation2] sm:$0xff] %v323
        $region56: #{tpu_custom_call.1} parent=39 // pred_fallthru
          _
        %p325 = scmp.lt.s32.totalorder %s26, 2
        // Predicated region
        $region57: #{tpu_custom_call.1} parent=39 // pred_check
          %p326 = pneg %p325
        $region58: #{tpu_custom_call.1} parent=39 // pred_check_branch
          %328 = sbr.rel (%p326) target = $region60
        $region59: #{tpu_custom_call.1} parent=39 // pred_region
          %v329 = vld [vmem:[#allocation2] sm:$0xff]
          %v330 = vpack.c.bf16 %v329, %v329
          %v331 = vld [vmem:[%s278] sm:$0xf]
          %v332 = vld [vmem:[%s278 + $0x4] sm:$0xf]
          %v333 = vld [vmem:[%s278 + $0x8] sm:$0xf]
          %v334 = vld [vmem:[%s278 + $0xc] sm:$0xf]
          %v335 = vld [vmem:[%s278 + $0x10] sm:$0xf]
          %v336 = vld [vmem:[%s278 + $0x14] sm:$0xf]
          %v337 = vld [vmem:[%s278 + $0x18] sm:$0xf]
          %v338 = vld [vmem:[%s278 + $0x1c] sm:$0xf]
          %v339 = vld [vmem:[%s278 + $0x20] sm:$0xf]
          %v340 = vld [vmem:[%s278 + $0x24] sm:$0xf]
          %v341 = vld [vmem:[%s278 + $0x28] sm:$0xf]
          %v342 = vld [vmem:[%s278 + $0x2c] sm:$0xf]
          %v343 = vld [vmem:[%s278 + $0x30] sm:$0xf]
          %v344 = vld [vmem:[%s278 + $0x34] sm:$0xf]
          %v345 = vld [vmem:[%s278 + $0x38] sm:$0xf]
          %v346 = vld [vmem:[%s278 + $0x3c] sm:$0xf]
          %v347 = vld [vmem:[%s315] sm:$0x1]
          %v349 = vlaneseq
          %v350 = vshrl.u32 %v349, 7
          %v351 = vsub.s32 0, %v350
          %v352 = vrot.slane %v347, %v351
          %v370 = vunpack.c.l.b16 %v331
          %v371 = vunpack.c.l.b16 %v332
          %v372 = vunpack.c.l.b16 %v333
          %v373 = vunpack.c.l.b16 %v334
          %v374 = vunpack.c.l.b16 %v335
          %v375 = vunpack.c.l.b16 %v336
          %v376 = vunpack.c.l.b16 %v337
          %v377 = vunpack.c.l.b16 %v338
          %v378 = vunpack.c.l.b16 %v339
          %v379 = vunpack.c.l.b16 %v340
          %v380 = vunpack.c.l.b16 %v341
          %v381 = vunpack.c.l.b16 %v342
          %v382 = vunpack.c.l.b16 %v343
          %v383 = vunpack.c.l.b16 %v344
          %v384 = vunpack.c.l.b16 %v345
          %v385 = vunpack.c.l.b16 %v346
          %v386 = vpack.c.b16 %v371, %v370
          %v387 = vpack.c.b16 %v373, %v372
          %v388 = vpack.c.b16 %v375, %v374
          %v389 = vpack.c.b16 %v377, %v376
          %v390 = vpack.c.b16 %v379, %v378
          %v391 = vpack.c.b16 %v381, %v380
          %v392 = vpack.c.b16 %v383, %v382
          %v393 = vpack.c.b16 %v385, %v384
          %402 = vmatprep.subr.bf16.mxu0 0
          %403 = vmatpush1.bf16.msra.mxu0 %v386
          %404 = vmatprep.subr.bf16.mxu0 0
          %405 = vmatpush1.bf16.msra.mxu0 %v387
          %406 = vmatprep.subr.bf16.mxu0 0
          %407 = vmatpush1.bf16.msra.mxu0 %v388
          %408 = vmatprep.subr.bf16.mxu0 0
          %409 = vmatpush1.bf16.msra.mxu0 %v389
          %410 = vmatprep.subr.bf16.mxu0 0
          %411 = vmatpush1.bf16.msra.mxu0 %v390
          %412 = vmatprep.subr.bf16.mxu0 0
          %413 = vmatpush1.bf16.msra.mxu0 %v391
          %414 = vmatprep.subr.bf16.mxu0 0
          %415 = vmatpush1.bf16.msra.mxu0 %v392
          %416 = vmatprep.subr.bf16.mxu0 0
          %417 = vmatpush1.bf16.msra.mxu0 %v393
          %418 = vmatprep.subr.bf16.mxu0 0
          %419 = vmatpush1.bf16.msra.mxu0 0
          %420 = vmatprep.subr.bf16.mxu0 0
          %421 = vmatpush1.bf16.msra.mxu0 0
          %422 = vmatprep.subr.bf16.mxu0 0
          %423 = vmatpush1.bf16.msra.mxu0 0
          %424 = vmatprep.subr.bf16.mxu0 0
          %425 = vmatpush1.bf16.msra.mxu0 0
          %426 = vmatprep.subr.bf16.mxu0 0
          %427 = vmatpush1.bf16.msra.mxu0 0
          %428 = vmatprep.subr.bf16.mxu0 0
          %429 = vmatpush1.bf16.msra.mxu0 0
          %430 = vmatprep.subr.bf16.mxu0 0
          %431 = vmatpush1.bf16.msra.mxu0 0
          %432 = vmatprep.subr.bf16.mxu0 0
          %433 = vmatpush1.bf16.msra.mxu0 0
          %434 = vmatprep.mubr.bf16.mxu0 0
          %435 = vmatmul.mubr.bf16.gmra.mrb[0].mxu0 %v330
          %v436 = vpop.f32.mrb[0].mxu0
          %v437 = vadd.f32 %v352, %v436
          %v438 = vpop.f32.mrb[0].mxu0
          %v439 = vpop.f32.mrb[0].mxu0
          %v440 = vpop.f32.mrb[0].mxu0
          %441 = vdwg.mxu0
          %v442 = vmax.f32 %v437, 0.0
          %443 = vst [vmem:[#allocation2] sm:$0xff] %v442
        $region60: #{tpu_custom_call.1} parent=39 // pred_fallthru
          _
        %p444 = scmp.eq.s32.totalorder %s26, 2
        // Predicated region
        $region61: #{tpu_custom_call.1} parent=39 // pred_check
          %p445 = pneg %p444
        $region62: #{tpu_custom_call.1} parent=39 // pred_check_branch
          %447 = sbr.rel (%p445) target = $region64
        $region63: #{tpu_custom_call.1} parent=39 // pred_region
          %v448 = vld [vmem:[#allocation2] sm:$0xff]
          %v449 = vpack.c.bf16 %v448, %v448
          %v450 = vld [vmem:[#allocation8] sm:$0xf]
          %v451 = vld [vmem:[#allocation8 + $0x4] sm:$0xf]
          %v452 = vld [vmem:[#allocation8 + $0x8] sm:$0xf]
          %v453 = vld [vmem:[#allocation8 + $0xc] sm:$0xf]
          %v454 = vld [vmem:[#allocation8 + $0x10] sm:$0xf]
          %v455 = vld [vmem:[#allocation8 + $0x14] sm:$0xf]
          %v456 = vld [vmem:[#allocation8 + $0x18] sm:$0xf]
          %v457 = vld [vmem:[#allocation8 + $0x1c] sm:$0xf]
          %v458 = vld [vmem:[#allocation8 + $0x20] sm:$0xf]
          %v459 = vld [vmem:[#allocation8 + $0x24] sm:$0xf]
          %v460 = vld [vmem:[#allocation8 + $0x28] sm:$0xf]
          %v461 = vld [vmem:[#allocation8 + $0x2c] sm:$0xf]
          %v462 = vld [vmem:[#allocation8 + $0x30] sm:$0xf]
          %v463 = vld [vmem:[#allocation8 + $0x34] sm:$0xf]
          %v464 = vld [vmem:[#allocation8 + $0x38] sm:$0xf]
          %v465 = vld [vmem:[#allocation8 + $0x3c] sm:$0xf]
          %v466 = vld [vmem:[%s4] sm:$0x1]
          %v468 = vlaneseq
          %v469 = vshrl.u32 %v468, 7
          %v470 = vsub.s32 0, %v469
          %v471 = vrot.slane %v466, %v470
          %v489 = vunpack.c.l.b16 %v450
          %v490 = vunpack.c.l.b16 %v451
          %v491 = vunpack.c.l.b16 %v452
          %v492 = vunpack.c.l.b16 %v453
          %v493 = vunpack.c.l.b16 %v454
          %v494 = vunpack.c.l.b16 %v455
          %v495 = vunpack.c.l.b16 %v456
          %v496 = vunpack.c.l.b16 %v457
          %v497 = vunpack.c.l.b16 %v458
          %v498 = vunpack.c.l.b16 %v459
          %v499 = vunpack.c.l.b16 %v460
          %v500 = vunpack.c.l.b16 %v461
          %v501 = vunpack.c.l.b16 %v462
          %v502 = vunpack.c.l.b16 %v463
          %v503 = vunpack.c.l.b16 %v464
          %v504 = vunpack.c.l.b16 %v465
          %v505 = vpack.c.b16 %v490, %v489
          %v506 = vpack.c.b16 %v492, %v491
          %v507 = vpack.c.b16 %v494, %v493
          %v508 = vpack.c.b16 %v496, %v495
          %v509 = vpack.c.b16 %v498, %v497
          %v510 = vpack.c.b16 %v500, %v499
          %v511 = vpack.c.b16 %v502, %v501
          %v512 = vpack.c.b16 %v504, %v503
          %521 = vmatprep.subr.bf16.mxu0 0
          %522 = vmatpush1.bf16.msra.mxu0 %v505
          %523 = vmatprep.subr.bf16.mxu0 0
          %524 = vmatpush1.bf16.msra.mxu0 %v506
          %525 = vmatprep.subr.bf16.mxu0 0
          %526 = vmatpush1.bf16.msra.mxu0 %v507
          %527 = vmatprep.subr.bf16.mxu0 0
          %528 = vmatpush1.bf16.msra.mxu0 %v508
          %529 = vmatprep.subr.bf16.mxu0 0
          %530 = vmatpush1.bf16.msra.mxu0 %v509
          %531 = vmatprep.subr.bf16.mxu0 0
          %532 = vmatpush1.bf16.msra.mxu0 %v510
          %533 = vmatprep.subr.bf16.mxu0 0
          %534 = vmatpush1.bf16.msra.mxu0 %v511
          %535 = vmatprep.subr.bf16.mxu0 0
          %536 = vmatpush1.bf16.msra.mxu0 %v512
          %537 = vmatprep.subr.bf16.mxu0 0
          %538 = vmatpush1.bf16.msra.mxu0 0
          %539 = vmatprep.subr.bf16.mxu0 0
          %540 = vmatpush1.bf16.msra.mxu0 0
          %541 = vmatprep.subr.bf16.mxu0 0
          %542 = vmatpush1.bf16.msra.mxu0 0
          %543 = vmatprep.subr.bf16.mxu0 0
          %544 = vmatpush1.bf16.msra.mxu0 0
          %545 = vmatprep.subr.bf16.mxu0 0
          %546 = vmatpush1.bf16.msra.mxu0 0
          %547 = vmatprep.subr.bf16.mxu0 0
          %548 = vmatpush1.bf16.msra.mxu0 0
          %549 = vmatprep.subr.bf16.mxu0 0
          %550 = vmatpush1.bf16.msra.mxu0 0
          %551 = vmatprep.subr.bf16.mxu0 0
          %552 = vmatpush1.bf16.msra.mxu0 0
          %553 = vmatprep.mubr.bf16.mxu0 0
          %554 = vmatmul.mubr.bf16.gmra.mrb[0].mxu0 %v449
          %v555 = vpop.f32.mrb[0].mxu0
          %v556 = vadd.f32 %v471, %v555
          %v557 = vpop.f32.mrb[0].mxu0
          %v558 = vpop.f32.mrb[0].mxu0
          %v559 = vpop.f32.mrb[0].mxu0
          %560 = vdwg.mxu0
          %v561 = vmax.f32 %v556, 0.0
          %562 = vst [vmem:[#allocation9] sm:$0xff] %v561
        $region64: #{tpu_custom_call.1} parent=39 // pred_fallthru
          _
        // Predicated region
        $region65: #{tpu_custom_call.1} parent=39 // pred_check
          %p563 = pneg %p179
        $region66: #{tpu_custom_call.1} parent=39 // pred_check_branch
          %565 = sbr.rel (%p563) target = $region68
        $region67: #{tpu_custom_call.1} parent=39 // pred_region
          %s567 = ssub.s32 128, 128
          %568 = vsyncadd [#allocation5], %s567
          %s569 = smul.addr %s25, 128
          %s570 = scalar_lea.hbm %s5, %s569
          %s572 = sshll.u32 [#allocation9], 4
          %s573 = int_to_ptr.vmem [resolvable:$true] %s572
          %575 = dma.vmem_to_hbm [thread:$0]  %s573, 128, %s570, [#allocation5]
        $region68: #{tpu_custom_call.1} parent=39 // pred_fallthru
          _
        // Predicated region
        $region69: #{tpu_custom_call.1} parent=39 // pred_check
          %p576 = pneg %p179
        $region70: #{tpu_custom_call.1} parent=39 // pred_check_branch
          %578 = sbr.rel (%p576) target = $region72
        $region71: #{tpu_custom_call.1} parent=39 // pred_region
          %579 = dma.done [#allocation5], 128
        $region72: #{tpu_custom_call.1} parent=39 // pred_fallthru
          _
      $region40: #{tpu_custom_call.1} parent=5 // pred_fallthru
        _
      %p580 = scmp.le.s32.totalorder 2, %s16
      // Predicated region
      $region73: #{tpu_custom_call.1} parent=5 // pred_check
        %p581 = pneg %p580
      $region74: #{tpu_custom_call.1} parent=5 // pred_check_branch
        %583 = sbr.rel (%p581) target = $region76
      $region75: #{tpu_custom_call.1} parent=5 // pred_region
        %s584 = ssub.s32 %s16, 2
      $region76: #{tpu_custom_call.1} parent=5 // pred_fallthru
        _
    $region6: #{tpu_custom_call.1} parent=1 // loop_footer
      %s20 = sadd.s32 1, %s16
    $region7: #{tpu_custom_call.1} parent=1 // loop_footer_branch
      %15 = sbr.rel target = $region3
    $region8: #{tpu_custom_call.1} parent=1 // loop_exit
      _
    %585 = vsyncpa [#allocation4], 1
    %s586 = scalar_lea.sflag [#allocation4], 1
    %587 = vsyncpa %s586, 1
    %588 = vsyncpa [#allocation7], 1
    %s589 = scalar_lea.sflag [#allocation7], 1
    %590 = vsyncpa %s589, 1
    %591 = vsyncpa [#allocation5], 1
    %s592 = scalar_lea.sflag [#allocation5], 1
    %593 = vsyncpa %s592, 1

</llo_original>
